<compile_context>
chip_gen: v6e
topology: v6e:2x2x1
jax: 0.10.0
libtpu: 0.0.40
codegen_flags: <defaults>
</compile_context>

<pallas_src>
import functools

import jax
import jax.numpy as jnp
import numpy as np
from jax import lax
from jax.experimental import pallas as pl
from jax.experimental.pallas import tpu as pltpu


# ----------------------------------------------------------------------------
# Fused kernel: one grid step == one batch block, everything stays in VMEM.
# ----------------------------------------------------------------------------
def _seg_fused_kernel(cols_ref, w36_ref, bb_ref, whT_ref, bh_ref, bt_ref, o_ref,
                      *, B_blk, S, num_cls):
    # cols_ref: (B_blk*S, 9*C_in) bf16 im2col rows for B_blk images.
    # Backbone: one K=36 MXU matmul, f32 accumulate, bias+ReLU epilogue in f32.
    hid = jnp.dot(cols_ref[...], w36_ref[...],
                  preferred_element_type=jnp.float32)                  # (M, C_hid)
    hid = jnp.maximum(hid + bb_ref[...], 0.0)

    # Head: 1x1 conv == matmul (bf16 operands, f32 accumulate) + bias.
    feat = jnp.dot(hid.astype(jnp.bfloat16), whT_ref[...],
                   preferred_element_type=jnp.float32) + bh_ref[...]   # (M, num_cls)
    feat = feat.astype(jnp.bfloat16)

    # Bilinear upsample folded into one (S, P) bf16 matrix; per image a single
    # (num_cls, S) x (S, P) MXU contraction -> lane-dense (num_cls, P) store.
    bt = bt_ref[...]                                                   # (S, P) bf16
    for b in range(B_blk):
        fb = feat[b * S:(b + 1) * S, :]                                # (S, num_cls)
        ob = lax.dot_general(fb, bt, (((0,), (0,)), ((), ())),
                             preferred_element_type=jnp.float32)       # (num_cls, P)
        o_ref[b] = ob


# ----------------------------------------------------------------------------
# Host wrapper
# ----------------------------------------------------------------------------
def _interp_matrix(n_out, n_in):
    """PyTorch bilinear interpolation matrix, align_corners=False."""
    scale = n_in / n_out
    src = (jnp.arange(n_out, dtype=jnp.float32) + 0.5) * scale - 0.5
    src = jnp.maximum(src, 0.0)
    i0 = jnp.minimum(jnp.floor(src).astype(jnp.int32), n_in - 1)
    i1 = jnp.minimum(i0 + 1, n_in - 1)
    w1 = src - i0.astype(jnp.float32)
    w0 = 1.0 - w1
    return (w0[:, None] * jax.nn.one_hot(i0, n_in, dtype=jnp.float32)
            + w1[:, None] * jax.nn.one_hot(i1, n_in, dtype=jnp.float32))


def seg_model_forward(x, params, output_sizes=(32, 32)):
    N, C_in, H, W = x.shape
    wb, bb = params["backbone_w"], params["backbone_b"]   # (C_hid, C_in, 3, 3), (C_hid,)
    wh, bh = params["head_w"], params["head_b"]           # (num_cls, C_hid, 1, 1), (num_cls,)
    C_hid, num_cls = wb.shape[0], wh.shape[0]
    k, stride, pad = 3, 2, 1
    Ho = (H + 2 * pad - k) // stride + 1
    Wo = (W + 2 * pad - k) // stride + 1
    S = Ho * Wo
    H_out, W_out = output_sizes
    P = H_out * W_out
    Kc = k * k * C_in

    # ---- batch blocking: M = B_blk*S matmul rows per grid step (~256) -------
    B_blk = max(1, min(N, max(1, 256 // S)))
    N_pad = -(-N // B_blk) * B_blk

    # ---- host prep: im2col slab (tap-major, channel-minor), bf16 ------------
    xp = jnp.pad(x, ((0, 0), (0, 0), (pad, pad), (pad, pad)))
    taps = [xp[:, :, kh:kh + stride * Ho:stride, kw:kw + stride * Wo:stride]
            for kh in range(k) for kw in range(k)]        # each (N, C_in, Ho, Wo)
    cols = (jnp.stack(taps, axis=1)                       # (N, 9, C_in, Ho, Wo)
              .transpose(0, 3, 4, 1, 2)                   # (N, Ho, Wo, 9, C_in)
              .reshape(N, S, Kc).astype(jnp.bfloat16))
    if N_pad != N:
        cols = jnp.pad(cols, ((0, N_pad - N), (0, 0), (0, 0)))
    cols = cols.reshape(N_pad * S, Kc)

    # conv weight as (9*C_in, C_hid), same (kh, kw, ci) ordering as cols
    w36 = wb.transpose(2, 3, 1, 0).reshape(Kc, C_hid).astype(jnp.bfloat16)
    bb_r = bb.reshape(1, C_hid).astype(jnp.float32)
    whT = wh.reshape(num_cls, C_hid).T.astype(jnp.bfloat16)
    bh_r = bh.reshape(1, num_cls).astype(jnp.float32)

    # full bilinear matrix (kron of the two 1-D interpolation matrices), bf16
    wy = _interp_matrix(H_out, Ho)                        # (H_out, Ho)
    wx = _interp_matrix(W_out, Wo)                        # (W_out, Wo)
    btmat = jnp.kron(wy, wx).T.astype(jnp.bfloat16)       # (S, P)
    # TODO(synk): at production feature/output sizes replace the kron matrix with
    # a separable two-matmul upsample + M-tiled grid axis (v7x only has 64 MiB VMEM).

    kernel = functools.partial(_seg_fused_kernel, B_blk=B_blk, S=S, num_cls=num_cls)

    out_flat = pl.pallas_call(
        kernel,
        out_shape=jax.ShapeDtypeStruct((N_pad, num_cls, P), jnp.float32),
        grid=(N_pad // B_blk,),
        in_specs=[
            pl.BlockSpec((B_blk * S, Kc), lambda g: (g, 0)),
            # grid-invariant operands (constant index_maps).
            # TODO(synk): single-buffer these (pipeline_mode=pl.Buffered(1)) once
            # VMEM headroom matters at scaled-up sizes.
            pl.BlockSpec((Kc, C_hid), lambda g: (0, 0)),
            pl.BlockSpec((1, C_hid), lambda g: (0, 0)),
            pl.BlockSpec((C_hid, num_cls), lambda g: (0, 0)),
            pl.BlockSpec((1, num_cls), lambda g: (0, 0)),
            pl.BlockSpec((S, P), lambda g: (0, 0)),
        ],
        out_specs=pl.BlockSpec((B_blk, num_cls, P), lambda g: (g, 0, 0)),
        compiler_params=pltpu.CompilerParams(dimension_semantics=("parallel",)),
    )(cols, w36, bb_r, whT, bh_r, btmat)

    # lane-dense (N, C, P) from the kernel; cheap reshape to NCHW here.
    # TODO(synk): the `label is not None` branch is the same kernel with a
    # different static output size (label.shape[-2:]); not traced here.
    return out_flat[:N].reshape(N, num_cls, H_out, W_out)


# ----------------------------------------------------------------------------
# Pure-JAX f32 reference (for correctness validation)
# ----------------------------------------------------------------------------
def _seg_reference(x, params, output_sizes):
    wb, bb = params["backbone_w"], params["backbone_b"]
    wh, bh = params["head_w"], params["head_b"]
    hid = lax.conv_general_dilated(x, wb, window_strides=(2, 2),
                                   padding=((1, 1), (1, 1)),
                                   dimension_numbers=("NCHW", "OIHW", "NCHW"))
    hid = jax.nn.relu(hid + bb[None, :, None, None])
    feat = lax.conv_general_dilated(hid, wh, window_strides=(1, 1), padding="VALID",
                                    dimension_numbers=("NCHW", "OIHW", "NCHW"))
    feat = feat + bh[None, :, None, None]
    wy = _interp_matrix(output_sizes[0], feat.shape[2])
    wx = _interp_matrix(output_sizes[1], feat.shape[3])
    return jnp.einsum("nchw,Hh,Ww->ncHW", feat, wy, wx)


def init_params(key, c_in=4, c_hid=8, num_cls=3):
    k0, k1, k2, k3 = jax.random.split(key, 4)
    return {
        "backbone_w": 0.1 * jax.random.normal(k0, (c_hid, c_in, 3, 3), jnp.float32),
        "backbone_b": 0.1 * jax.random.normal(k1, (c_hid,), jnp.float32),
        "head_w": 0.1 * jax.random.normal(k2, (num_cls, c_hid, 1, 1), jnp.float32),
        "head_b": 0.1 * jax.random.normal(k3, (num_cls,), jnp.float32),
    }


if __name__ == "__main__":
    key = jax.random.PRNGKey(0)
    kx, kp = jax.random.split(key)
    x = jax.random.normal(kx, (2, 4, 16, 16), jnp.float32)   # NCHW input
    params = init_params(kp)

    fwd = jax.jit(functools.partial(seg_model_forward, output_sizes=(32, 32)))
    logits = fwd(x, params)
    jax.block_until_ready(logits)
    assert logits.shape == (2, 3, 32, 32), logits.shape

    ref = _seg_reference(x, params, (32, 32))
    np.testing.assert_allclose(np.asarray(logits), np.asarray(ref),
                               rtol=3e-2, atol=3e-2)
    print("KERNEL_OK")
</pallas_src>

<mosaic_0001>
module attributes {stable_mosaic.version = 11 : i64} {
  func.func @_seg_fused_kernel(%arg0: i32, %arg1: memref<128x36xbf16, #tpu.memory_space<vmem>>, %arg2: memref<36x8xbf16, #tpu.memory_space<vmem>>, %arg3: memref<1x8xf32, #tpu.memory_space<vmem>>, %arg4: memref<8x3xbf16, #tpu.memory_space<vmem>>, %arg5: memref<1x3xf32, #tpu.memory_space<vmem>>, %arg6: memref<64x1024xbf16, #tpu.memory_space<vmem>>, %arg7: memref<2x3x1024xf32, #tpu.memory_space<vmem>>) attributes {dimension_semantics = [#tpu.dimension_semantics<parallel>], iteration_bounds = array<i64: 1>, scalar_prefetch = 0 : i64, scratch_operands = 0 : i64, tpu.core_type = #tpu.core_type<tc>, window_params = [{transform_indices = @transform_0, window_bounds = array<i64: 128, 36>}, {pipeline_mode = #tpu.pipeline_mode<synchronous>, transform_indices = @transform_1, window_bounds = array<i64: 36, 8>}, {pipeline_mode = #tpu.pipeline_mode<synchronous>, transform_indices = @transform_2, window_bounds = array<i64: 1, 8>}, {pipeline_mode = #tpu.pipeline_mode<synchronous>, transform_indices = @transform_3, window_bounds = array<i64: 8, 3>}, {pipeline_mode = #tpu.pipeline_mode<synchronous>, transform_indices = @transform_4, window_bounds = array<i64: 1, 3>}, {pipeline_mode = #tpu.pipeline_mode<synchronous>, transform_indices = @transform_5, window_bounds = array<i64: 64, 1024>}, {transform_indices = @transform_6, window_bounds = array<i64: 2, 3, 1024>}]} {
    %c0 = arith.constant 0 : index
    %c0_0 = arith.constant 0 : index
    %0 = vector.load %arg1[%c0, %c0_0] : memref<128x36xbf16, #tpu.memory_space<vmem>>, vector<128x36xbf16>
    %c0_1 = arith.constant 0 : index
    %c0_2 = arith.constant 0 : index
    %1 = vector.load %arg2[%c0_1, %c0_2] : memref<36x8xbf16, #tpu.memory_space<vmem>>, vector<36x8xbf16>
    %cst = arith.constant dense<0.000000e+00> : vector<128x8xf32>
    %2 = tpu.matmul %0, %1, %cst {dimension_numbers = #tpu.dot_dimension_numbers<[1], [0], [0], [1], [0, 0, 1, 1], [], []>} : vector<128x36xbf16>, vector<36x8xbf16>, vector<128x8xf32> -> vector<128x8xf32>
    %c0_3 = arith.constant 0 : index
    %c0_4 = arith.constant 0 : index
    %3 = vector.load %arg3[%c0_3, %c0_4] : memref<1x8xf32, #tpu.memory_space<vmem>>, vector<1x8xf32>
    %4 = vector.broadcast %3 : vector<1x8xf32> to vector<128x8xf32>
    %5 = arith.addf %2, %4 : vector<128x8xf32>
    %cst_5 = arith.constant 0.000000e+00 : f32
    %6 = vector.broadcast %cst_5 : f32 to vector<128x8xf32>
    %7 = arith.maximumf %5, %6 : vector<128x8xf32>
    %8 = arith.truncf %7 : vector<128x8xf32> to vector<128x8xbf16>
    %c0_6 = arith.constant 0 : index
    %c0_7 = arith.constant 0 : index
    %9 = vector.load %arg4[%c0_6, %c0_7] : memref<8x3xbf16, #tpu.memory_space<vmem>>, vector<8x3xbf16>
    %cst_8 = arith.constant dense<0.000000e+00> : vector<128x3xf32>
    %10 = tpu.matmul %8, %9, %cst_8 {dimension_numbers = #tpu.dot_dimension_numbers<[1], [0], [0], [1], [0, 0, 1, 1], [], []>} : vector<128x8xbf16>, vector<8x3xbf16>, vector<128x3xf32> -> vector<128x3xf32>
    %c0_9 = arith.constant 0 : index
    %c0_10 = arith.constant 0 : index
    %11 = vector.load %arg5[%c0_9, %c0_10] : memref<1x3xf32, #tpu.memory_space<vmem>>, vector<1x3xf32>
    %12 = vector.broadcast %11 : vector<1x3xf32> to vector<128x3xf32>
    %13 = arith.addf %10, %12 : vector<128x3xf32>
    %14 = arith.truncf %13 : vector<128x3xf32> to vector<128x3xbf16>
    %c0_11 = arith.constant 0 : index
    %c0_12 = arith.constant 0 : index
    %15 = vector.load %arg6[%c0_11, %c0_12] : memref<64x1024xbf16, #tpu.memory_space<vmem>>, vector<64x1024xbf16>
    %16 = vector.extract_strided_slice %14 {offsets = [0, 0], sizes = [64, 3], strides = [1, 1]} : vector<128x3xbf16> to vector<64x3xbf16>
    %cst_13 = arith.constant dense<0.000000e+00> : vector<3x1024xf32>
    %17 = tpu.matmul %16, %15, %cst_13 {dimension_numbers = #tpu.dot_dimension_numbers<[0], [0], [1], [1], [0, 1, 1, 1], [], []>} : vector<64x3xbf16>, vector<64x1024xbf16>, vector<3x1024xf32> -> vector<3x1024xf32>
    %c0_14 = arith.constant 0 : index
    %c0_15 = arith.constant 0 : index
    %c0_16 = arith.constant 0 : index
    %18 = vector.load %arg7[%c0_14, %c0_15, %c0_16] : memref<2x3x1024xf32, #tpu.memory_space<vmem>>, vector<1x3x1024xf32>
    %19 = vector.shape_cast %18 : vector<1x3x1024xf32> to vector<3x1024xf32>
    %20 = vector.shape_cast %17 : vector<3x1024xf32> to vector<1x3x1024xf32>
    tpu.vector_store %arg7[%c0_14, %c0_15, %c0_16], %20 {strides = array<i32>} : memref<2x3x1024xf32, #tpu.memory_space<vmem>>, vector<1x3x1024xf32>,
    %21 = vector.extract_strided_slice %14 {offsets = [64, 0], sizes = [64, 3], strides = [1, 1]} : vector<128x3xbf16> to vector<64x3xbf16>
    %cst_17 = arith.constant dense<0.000000e+00> : vector<3x1024xf32>
    %22 = tpu.matmul %21, %15, %cst_17 {dimension_numbers = #tpu.dot_dimension_numbers<[0], [0], [1], [1], [0, 1, 1, 1], [], []>} : vector<64x3xbf16>, vector<64x1024xbf16>, vector<3x1024xf32> -> vector<3x1024xf32>
    %c1 = arith.constant 1 : index
    %c0_18 = arith.constant 0 : index
    %c0_19 = arith.constant 0 : index
    %23 = vector.load %arg7[%c1, %c0_18, %c0_19] : memref<2x3x1024xf32, #tpu.memory_space<vmem>>, vector<1x3x1024xf32>
    %24 = vector.shape_cast %23 : vector<1x3x1024xf32> to vector<3x1024xf32>
    %25 = vector.shape_cast %22 : vector<3x1024xf32> to vector<1x3x1024xf32>
    tpu.vector_store %arg7[%c1, %c0_18, %c0_19], %25 {strides = array<i32>} : memref<2x3x1024xf32, #tpu.memory_space<vmem>>, vector<1x3x1024xf32>,
    return
  }
  func.func @transform_0(%arg0: i32) -> (i32, i32) {
    %c0_i32 = arith.constant 0 : i32
    %c0_i32_0 = arith.constant 0 : i32
    return %arg0, %c0_i32 : i32, i32
  }
  func.func @transform_1(%arg0: i32) -> (i32, i32) {
    %c0_i32 = arith.constant 0 : i32
    %c0_i32_0 = arith.constant 0 : i32
    %c0_i32_1 = arith.constant 0 : i32
    return %c0_i32, %c0_i32_0 : i32, i32
  }
  func.func @transform_2(%arg0: i32) -> (i32, i32) {
    %c0_i32 = arith.constant 0 : i32
    %c0_i32_0 = arith.constant 0 : i32
    %c0_i32_1 = arith.constant 0 : i32
    return %c0_i32, %c0_i32_0 : i32, i32
  }
  func.func @transform_3(%arg0: i32) -> (i32, i32) {
    %c0_i32 = arith.constant 0 : i32
    %c0_i32_0 = arith.constant 0 : i32
    %c0_i32_1 = arith.constant 0 : i32
    return %c0_i32, %c0_i32_0 : i32, i32
  }
  func.func @transform_4(%arg0: i32) -> (i32, i32) {
    %c0_i32 = arith.constant 0 : i32
    %c0_i32_0 = arith.constant 0 : i32
    %c0_i32_1 = arith.constant 0 : i32
    return %c0_i32, %c0_i32_0 : i32, i32
  }
  func.func @transform_5(%arg0: i32) -> (i32, i32) {
    %c0_i32 = arith.constant 0 : i32
    %c0_i32_0 = arith.constant 0 : i32
    %c0_i32_1 = arith.constant 0 : i32
    return %c0_i32, %c0_i32_0 : i32, i32
  }
  func.func @transform_6(%arg0: i32) -> (i32, i32, i32) {
    %c0_i32 = arith.constant 0 : i32
    %c0_i32_0 = arith.constant 0 : i32
    %c0_i32_1 = arith.constant 0 : i32
    return %arg0, %c0_i32, %c0_i32_0 : i32, i32, i32
  }
}

</mosaic_0001>

<llo_original>
// kernel: seg_model_forward.1
$region0: #{seg_model_forward.1}
  #allocation0 [shape = 'u32[]', space=smem, size = 0x4, offset = 0x4, fixed_abs, tag = 'smem constant byte address 0x4 - core index']
  #allocation1 [shape = 'u32[144,128]{1,0:T(1,128)}', space=vmem, size = 0x12000, scoped, tag = 'internal scratch']
  %s0 = inlined_call_operand.vmem [shape: bf16[128,36], index: 0, kind: input, shape index: {}]
  %s1 = inlined_call_operand.vmem [shape: bf16[36,8], index: 1, kind: input, shape index: {}]
  %s2 = inlined_call_operand.vmem [shape: f32[1,8], index: 2, kind: input, shape index: {}]
  %s3 = inlined_call_operand.vmem [shape: bf16[8,3], index: 3, kind: input, shape index: {}]
  %s4 = inlined_call_operand.vmem [shape: f32[1,3], index: 4, kind: input, shape index: {}]
  %s5 = inlined_call_operand.vmem [shape: bf16[64,1024], index: 5, kind: input, shape index: {}]
  %s6 = inlined_call_operand.vmem [shape: f32[2,3,1024], index: 6, kind: output, shape index: {}]
  %s7 = sld [smem:[#allocation0]]
  $region34: #{seg_model_forward.1} parent=0
    _
  %s9 = ssub.s32 1, %s7
  %s10 = scalar_select 0, %s9, %s7
  // Predicated region
  $region2: #{seg_model_forward.1} parent=0 // pred_check
    _
  $region3: #{seg_model_forward.1} parent=0 // pred_check_branch
    %12 = sbr.rel (0) target = $region5
  $region4: #{seg_model_forward.1} parent=0 // pred_region
    _
  $region5: #{seg_model_forward.1} parent=0 // pred_fallthru
    _
  // Predicated region
  $region6: #{seg_model_forward.1} parent=0 // pred_check
    _
  $region7: #{seg_model_forward.1} parent=0 // pred_check_branch
    %14 = sbr.rel (0) target = $region9
  $region8: #{seg_model_forward.1} parent=0 // pred_region
    _
  $region9: #{seg_model_forward.1} parent=0 // pred_fallthru
    _
  // Predicated region
  $region10: #{seg_model_forward.1} parent=0 // pred_check
    _
  $region11: #{seg_model_forward.1} parent=0 // pred_check_branch
    %16 = sbr.rel (0) target = $region13
  $region12: #{seg_model_forward.1} parent=0 // pred_region
    _
  $region13: #{seg_model_forward.1} parent=0 // pred_fallthru
    _
  // Predicated region
  $region14: #{seg_model_forward.1} parent=0 // pred_check
    _
  $region15: #{seg_model_forward.1} parent=0 // pred_check_branch
    %18 = sbr.rel (0) target = $region17
  $region16: #{seg_model_forward.1} parent=0 // pred_region
    _
  $region17: #{seg_model_forward.1} parent=0 // pred_fallthru
    _
  // Predicated region
  $region18: #{seg_model_forward.1} parent=0 // pred_check
    _
  $region19: #{seg_model_forward.1} parent=0 // pred_check_branch
    %20 = sbr.rel (0) target = $region21
  $region20: #{seg_model_forward.1} parent=0 // pred_region
    _
  $region21: #{seg_model_forward.1} parent=0 // pred_fallthru
    _
  // Predicated region
  $region22: #{seg_model_forward.1} parent=0 // pred_check
    _
  $region23: #{seg_model_forward.1} parent=0 // pred_check_branch
    %22 = sbr.rel (0) target = $region25
  $region24: #{seg_model_forward.1} parent=0 // pred_region
    _
  $region25: #{seg_model_forward.1} parent=0 // pred_fallthru
    _
  %v24 = vld [vmem:[%s0] sm:$0xf]
  %v25 = vld [vmem:[%s0 + $0x4] sm:$0xf]
  %v26 = vld [vmem:[%s0 + $0x8] sm:$0xf]
  %v27 = vld [vmem:[%s0 + $0xc] sm:$0xf]
  %v28 = vld [vmem:[%s0 + $0x10] sm:$0xf]
  %v29 = vld [vmem:[%s0 + $0x14] sm:$0xf]
  %v30 = vld [vmem:[%s0 + $0x18] sm:$0xf]
  %v31 = vld [vmem:[%s0 + $0x1c] sm:$0xf]
  %v32 = vld [vmem:[%s0 + $0x20] sm:$0xf]
  %v33 = vld [vmem:[%s0 + $0x24] sm:$0xf]
  %v34 = vld [vmem:[%s0 + $0x28] sm:$0xf]
  %v35 = vld [vmem:[%s0 + $0x2c] sm:$0xf]
  %v36 = vld [vmem:[%s0 + $0x30] sm:$0xf]
  %v37 = vld [vmem:[%s0 + $0x34] sm:$0xf]
  %v38 = vld [vmem:[%s0 + $0x38] sm:$0xf]
  %v39 = vld [vmem:[%s0 + $0x3c] sm:$0xf]
  %v40 = vld [vmem:[%s1] sm:$0xf]
  %v41 = vld [vmem:[%s1 + $0x4] sm:$0xf]
  %v42 = vld [vmem:[%s1 + $0x8] sm:$0xf]
  %v43 = vld [vmem:[%s1 + $0xc] sm:$0xf]
  %v44 = vld [vmem:[%s1 + $0x10] sm:$0x3]
  %v45 = vld [vmem:[%s2] sm:$0x1]
  %v47 = vlaneseq
  %v48 = vshrl.u32 %v47, 7
  %v49 = vsub.s32 0, %v48
  %v50 = vrot.slane %v45, %v49
  %v68 = vunpack.c.l.b16 %v24
  %v69 = vunpack.c.l.b16 %v25
  %v70 = vunpack.c.l.b16 %v26
  %v71 = vunpack.c.l.b16 %v27
  %v72 = vunpack.c.l.b16 %v28
  %v73 = vunpack.c.l.b16 %v29
  %v74 = vunpack.c.l.b16 %v30
  %v75 = vunpack.c.l.b16 %v31
  %v76 = vunpack.c.l.b16 %v32
  %v77 = vunpack.c.l.b16 %v33
  %v78 = vunpack.c.l.b16 %v34
  %v79 = vunpack.c.l.b16 %v35
  %v80 = vunpack.c.l.b16 %v36
  %v81 = vunpack.c.l.b16 %v37
  %v82 = vunpack.c.l.b16 %v38
  %v83 = vunpack.c.l.b16 %v39
  %v84 = vpack.c.b16 %v69, %v68
  %v85 = vpack.c.b16 %v71, %v70
  %v86 = vpack.c.b16 %v73, %v72
  %v87 = vpack.c.b16 %v75, %v74
  %v88 = vpack.c.b16 %v77, %v76
  %v89 = vpack.c.b16 %v79, %v78
  %v90 = vpack.c.b16 %v81, %v80
  %v91 = vpack.c.b16 %v83, %v82
  %v97 = vunpack.c.l.b16 %v40
  %v98 = vunpack.c.l.b16 %v41
  %v99 = vunpack.c.l.b16 %v42
  %v100 = vunpack.c.l.b16 %v43
  %v101 = vunpack.c.l.b16 %v44
  %v102 = vpack.c.b16 %v98, %v97
  %v103 = vpack.c.b16 %v100, %v99
  %v104 = vpack.c.b16 %v101, %v101
  %vm107 = vcmask 293888
  %v109 = vsel %vm107, %v84, 0
  %v112 = vsel %vm107, %v85, 0
  %v115 = vsel %vm107, %v86, 0
  %v118 = vsel %vm107, %v87, 0
  %v121 = vsel %vm107, %v88, 0
  %v124 = vsel %vm107, %v89, 0
  %v127 = vsel %vm107, %v90, 0
  %v130 = vsel %vm107, %v91, 0
  %vm132 = vcmask 1041408
  %v134 = vsel %vm132, %v104, 0
  %136 = vmatprep.subr.bf16.mxu0 0
  %137 = vmatpush1.bf16.msra.mxu0 0
  %138 = vmatprep.subr.bf16.mxu0 0
  %139 = vmatpush1.bf16.msra.mxu0 0
  %140 = vmatprep.subr.bf16.mxu0 0
  %141 = vmatpush1.bf16.msra.mxu0 0
  %142 = vmatprep.subr.bf16.mxu0 0
  %143 = vmatpush1.bf16.msra.mxu0 0
  %144 = vmatprep.subr.bf16.mxu0 0
  %145 = vmatpush1.bf16.msra.mxu0 0
  %146 = vmatprep.subr.bf16.mxu0 0
  %147 = vmatpush1.bf16.msra.mxu0 %v134
  %148 = vmatprep.subr.bf16.mxu0 0
  %149 = vmatpush1.bf16.msra.mxu0 %v103
  %150 = vmatprep.subr.bf16.mxu0 0
  %151 = vmatpush1.bf16.msra.mxu0 %v102
  %152 = vmatprep.subr.bf16.mxu0 0
  %153 = vmatpush2.bf16.msra.mxu0 0
  %154 = vmatprep.subr.bf16.mxu0 0
  %155 = vmatpush2.bf16.msra.mxu0 0
  %156 = vmatprep.subr.bf16.mxu0 0
  %157 = vmatpush2.bf16.msra.mxu0 0
  %158 = vmatprep.subr.bf16.mxu0 0
  %159 = vmatpush2.bf16.msra.mxu0 0
  %160 = vmatprep.subr.bf16.mxu0 0
  %161 = vmatpush2.bf16.msra.mxu0 0
  %162 = vmatprep.subr.bf16.mxu0 0
  %163 = vmatpush2.bf16.msra.mxu0 0
  %164 = vmatprep.subr.bf16.mxu0 0
  %165 = vmatpush2.bf16.msra.mxu0 0
  %166 = vmatprep.subr.bf16.mxu0 0
  %167 = vmatpush2.bf16.msra.mxu0 0
  %168 = vmatprep.mubr.bf16.mxu0 0
  %169 = vmatmul.mubr.bf16.gmra.mxu0 %v109
  %v170 = vpop.f32.mrf.mxu0
  %v171 = vadd.f32 %v50, %v170
  %v172 = vpop.f32.mrf.mxu0
  %v173 = vpop.f32.mrf.mxu0
  %v174 = vadd.f32 %v50, %v173
  %v175 = vpop.f32.mrf.mxu0
  %176 = vmatprep.mubr.bf16.mxu0 0
  %177 = vmatmul.mubr.bf16.gmra.mxu0 %v112
  %v178 = vpop.f32.mrf.mxu0
  %v179 = vadd.f32 %v50, %v178
  %v180 = vpop.f32.mrf.mxu0
  %v181 = vpop.f32.mrf.mxu0
  %v182 = vadd.f32 %v50, %v181
  %v183 = vpop.f32.mrf.mxu0
  %184 = vmatprep.mubr.bf16.mxu0 0
  %185 = vmatmul.mubr.bf16.gmra.mxu0 %v115
  %v186 = vpop.f32.mrf.mxu0
  %v187 = vadd.f32 %v50, %v186
  %v188 = vpop.f32.mrf.mxu0
  %v189 = vpop.f32.mrf.mxu0
  %v190 = vadd.f32 %v50, %v189
  %v191 = vpop.f32.mrf.mxu0
  %192 = vmatprep.mubr.bf16.mxu0 0
  %193 = vmatmul.mubr.bf16.gmra.mxu0 %v118
  %v194 = vpop.f32.mrf.mxu0
  %v195 = vadd.f32 %v50, %v194
  %v196 = vpop.f32.mrf.mxu0
  %v197 = vpop.f32.mrf.mxu0
  %v198 = vadd.f32 %v50, %v197
  %v199 = vpop.f32.mrf.mxu0
  %200 = vmatprep.mubr.bf16.mxu0 0
  %201 = vmatmul.mubr.bf16.gmra.mxu0 %v121
  %v202 = vpop.f32.mrf.mxu0
  %v203 = vadd.f32 %v50, %v202
  %v204 = vpop.f32.mrf.mxu0
  %v205 = vpop.f32.mrf.mxu0
  %v206 = vadd.f32 %v50, %v205
  %v207 = vpop.f32.mrf.mxu0
  %208 = vmatprep.mubr.bf16.mxu0 0
  %209 = vmatmul.mubr.bf16.gmra.mxu0 %v124
  %v210 = vpop.f32.mrf.mxu0
  %v211 = vadd.f32 %v50, %v210
  %v212 = vpop.f32.mrf.mxu0
  %v213 = vpop.f32.mrf.mxu0
  %v214 = vadd.f32 %v50, %v213
  %v215 = vpop.f32.mrf.mxu0
  %216 = vmatprep.mubr.bf16.mxu0 0
  %217 = vmatmul.mubr.bf16.gmra.mxu0 %v127
  %v218 = vpop.f32.mrf.mxu0
  %v219 = vadd.f32 %v50, %v218
  %v220 = vpop.f32.mrf.mxu0
  %v221 = vpop.f32.mrf.mxu0
  %v222 = vadd.f32 %v50, %v221
  %v223 = vpop.f32.mrf.mxu0
  %224 = vmatprep.mubr.bf16.mxu0 0
  %225 = vmatmul.mubr.bf16.gmra.mxu0 %v130
  %v226 = vpop.f32.mrf.mxu0
  %v227 = vadd.f32 %v50, %v226
  %v228 = vpop.f32.mrf.mxu0
  %v229 = vpop.f32.mrf.mxu0
  %v230 = vadd.f32 %v50, %v229
  %v231 = vpop.f32.mrf.mxu0
  %232 = vdwg.mxu0
  %v233 = vmax.f32 %v171, 0.0
  %v234 = vmax.f32 %v174, 0.0
  %v235 = vmax.f32 %v179, 0.0
  %v236 = vmax.f32 %v182, 0.0
  %v237 = vmax.f32 %v187, 0.0
  %v238 = vmax.f32 %v190, 0.0
  %v239 = vmax.f32 %v195, 0.0
  %v240 = vmax.f32 %v198, 0.0
  %v241 = vmax.f32 %v203, 0.0
  %v242 = vmax.f32 %v206, 0.0
  %v243 = vmax.f32 %v211, 0.0
  %v244 = vmax.f32 %v214, 0.0
  %v245 = vmax.f32 %v219, 0.0
  %v246 = vmax.f32 %v222, 0.0
  %v247 = vmax.f32 %v227, 0.0
  %v248 = vmax.f32 %v230, 0.0
  %v249 = vpack.c.bf16 %v234, %v233
  %v250 = vpack.c.bf16 %v236, %v235
  %v251 = vpack.c.bf16 %v238, %v237
  %v252 = vpack.c.bf16 %v240, %v239
  %v253 = vpack.c.bf16 %v242, %v241
  %v254 = vpack.c.bf16 %v244, %v243
  %v255 = vpack.c.bf16 %v246, %v245
  %v256 = vpack.c.bf16 %v248, %v247
  %v257 = vld [vmem:[%s3] sm:$0xf]
  %v258 = vld [vmem:[%s4] sm:$0x1]
  %v260 = vlaneseq
  %v261 = vshrl.u32 %v260, 7
  %v262 = vsub.s32 0, %v261
  %v263 = vrot.slane %v258, %v262
  %vm265 = vcmask 64512
  %v267 = vsel %vm265, %v249, 0
  %v270 = vsel %vm265, %v250, 0
  %v273 = vsel %vm265, %v251, 0
  %v276 = vsel %vm265, %v252, 0
  %v279 = vsel %vm265, %v253, 0
  %v282 = vsel %vm265, %v254, 0
  %v285 = vsel %vm265, %v255, 0
  %v288 = vsel %vm265, %v256, 0
  %vm290 = vcmask 1043456
  %v292 = vsel %vm290, %v257, 0
  %294 = vmatprep.subr.bf16.mxu0 0
  %295 = vmatpush1.bf16.msra.mxu0 0
  %296 = vmatprep.subr.bf16.mxu0 0
  %297 = vmatpush1.bf16.msra.mxu0 0
  %298 = vmatprep.subr.bf16.mxu0 0
  %299 = vmatpush1.bf16.msra.mxu0 0
  %300 = vmatprep.subr.bf16.mxu0 0
  %301 = vmatpush1.bf16.msra.mxu0 0
  %302 = vmatprep.subr.bf16.mxu0 0
  %303 = vmatpush1.bf16.msra.mxu0 0
  %304 = vmatprep.subr.bf16.mxu0 0
  %305 = vmatpush1.bf16.msra.mxu0 0
  %306 = vmatprep.subr.bf16.mxu0 0
  %307 = vmatpush1.bf16.msra.mxu0 0
  %308 = vmatprep.subr.bf16.mxu0 0
  %309 = vmatpush1.bf16.msra.mxu0 %v292
  %310 = vmatprep.subr.bf16.mxu0 0
  %311 = vmatpush2.bf16.msra.mxu0 0
  %312 = vmatprep.subr.bf16.mxu0 0
  %313 = vmatpush2.bf16.msra.mxu0 0
  %314 = vmatprep.subr.bf16.mxu0 0
  %315 = vmatpush2.bf16.msra.mxu0 0
  %316 = vmatprep.subr.bf16.mxu0 0
  %317 = vmatpush2.bf16.msra.mxu0 0
  %318 = vmatprep.subr.bf16.mxu0 0
  %319 = vmatpush2.bf16.msra.mxu0 0
  %320 = vmatprep.subr.bf16.mxu0 0
  %321 = vmatpush2.bf16.msra.mxu0 0
  %322 = vmatprep.subr.bf16.mxu0 0
  %323 = vmatpush2.bf16.msra.mxu0 0
  %324 = vmatprep.subr.bf16.mxu0 0
  %325 = vmatpush2.bf16.msra.mxu0 0
  %326 = vmatprep.mubr.bf16.mxu0 0
  %327 = vmatmul.mubr.bf16.gmra.mxu0 %v267
  %v328 = vpop.f32.mrf.mxu0
  %v329 = vadd.f32 %v263, %v328
  %v330 = vpop.f32.mrf.mxu0
  %v331 = vpop.f32.mrf.mxu0
  %v332 = vadd.f32 %v263, %v331
  %v333 = vpop.f32.mrf.mxu0
  %334 = vmatprep.mubr.bf16.mxu0 0
  %335 = vmatmul.mubr.bf16.gmra.mxu0 %v270
  %v336 = vpop.f32.mrf.mxu0
  %v337 = vadd.f32 %v263, %v336
  %v338 = vpop.f32.mrf.mxu0
  %v339 = vpop.f32.mrf.mxu0
  %v340 = vadd.f32 %v263, %v339
  %v341 = vpop.f32.mrf.mxu0
  %342 = vmatprep.mubr.bf16.mxu0 0
  %343 = vmatmul.mubr.bf16.gmra.mxu0 %v273
  %v344 = vpop.f32.mrf.mxu0
  %v345 = vadd.f32 %v263, %v344
  %v346 = vpop.f32.mrf.mxu0
  %v347 = vpop.f32.mrf.mxu0
  %v348 = vadd.f32 %v263, %v347
  %v349 = vpop.f32.mrf.mxu0
  %350 = vmatprep.mubr.bf16.mxu0 0
  %351 = vmatmul.mubr.bf16.gmra.mxu0 %v276
  %v352 = vpop.f32.mrf.mxu0
  %v353 = vadd.f32 %v263, %v352
  %v354 = vpop.f32.mrf.mxu0
  %v355 = vpop.f32.mrf.mxu0
  %v356 = vadd.f32 %v263, %v355
  %v357 = vpop.f32.mrf.mxu0
  %358 = vmatprep.mubr.bf16.mxu0 0
  %359 = vmatmul.mubr.bf16.gmra.mxu0 %v279
  %v360 = vpop.f32.mrf.mxu0
  %v361 = vadd.f32 %v263, %v360
  %v362 = vpop.f32.mrf.mxu0
  %v363 = vpop.f32.mrf.mxu0
  %v364 = vadd.f32 %v263, %v363
  %v365 = vpop.f32.mrf.mxu0
  %366 = vmatprep.mubr.bf16.mxu0 0
  %367 = vmatmul.mubr.bf16.gmra.mxu0 %v282
  %v368 = vpop.f32.mrf.mxu0
  %v369 = vadd.f32 %v263, %v368
  %v370 = vpop.f32.mrf.mxu0
  %v371 = vpop.f32.mrf.mxu0
  %v372 = vadd.f32 %v263, %v371
  %v373 = vpop.f32.mrf.mxu0
  %374 = vmatprep.mubr.bf16.mxu0 0
  %375 = vmatmul.mubr.bf16.gmra.mxu0 %v285
  %v376 = vpop.f32.mrf.mxu0
  %v377 = vadd.f32 %v263, %v376
  %v378 = vpop.f32.mrf.mxu0
  %v379 = vpop.f32.mrf.mxu0
  %v380 = vadd.f32 %v263, %v379
  %v381 = vpop.f32.mrf.mxu0
  %382 = vmatprep.mubr.bf16.mxu0 0
  %383 = vmatmul.mubr.bf16.gmra.mxu0 %v288
  %v384 = vpop.f32.mrf.mxu0
  %v385 = vadd.f32 %v263, %v384
  %v386 = vpop.f32.mrf.mxu0
  %v387 = vpop.f32.mrf.mxu0
  %v388 = vadd.f32 %v263, %v387
  %v389 = vpop.f32.mrf.mxu0
  %390 = vdwg.mxu0
  %v391 = vpack.c.bf16 %v332, %v329
  %v392 = vpack.c.bf16 %v340, %v337
  %v393 = vpack.c.bf16 %v348, %v345
  %v394 = vpack.c.bf16 %v356, %v353
  %v395 = vpack.c.bf16 %v364, %v361
  %v396 = vpack.c.bf16 %v372, %v369
  %v397 = vpack.c.bf16 %v380, %v377
  %v398 = vpack.c.bf16 %v388, %v385
  %v399 = vld [vmem:[%s5] sm:$0xff]
  %v400 = vld [vmem:[%s5 + $0x8] sm:$0xff]
  %v401 = vld [vmem:[%s5 + $0x10] sm:$0xff]
  %v402 = vld [vmem:[%s5 + $0x18] sm:$0xff]
  %v403 = vld [vmem:[%s5 + $0x20] sm:$0xff]
  %v404 = vld [vmem:[%s5 + $0x28] sm:$0xff]
  %v405 = vld [vmem:[%s5 + $0x30] sm:$0xff]
  %v406 = vld [vmem:[%s5 + $0x38] sm:$0xff]
  %v407 = vld [vmem:[%s5 + $0x40] sm:$0xff]
  %v408 = vld [vmem:[%s5 + $0x48] sm:$0xff]
  %v409 = vld [vmem:[%s5 + $0x50] sm:$0xff]
  %v410 = vld [vmem:[%s5 + $0x58] sm:$0xff]
  %v411 = vld [vmem:[%s5 + $0x60] sm:$0xff]
  %v412 = vld [vmem:[%s5 + $0x68] sm:$0xff]
  %v413 = vld [vmem:[%s5 + $0x70] sm:$0xff]
  %v414 = vld [vmem:[%s5 + $0x78] sm:$0xff]
  %v415 = vld [vmem:[%s5 + $0x80] sm:$0xff]
  %v416 = vld [vmem:[%s5 + $0x88] sm:$0xff]
  %v417 = vld [vmem:[%s5 + $0x90] sm:$0xff]
  %v418 = vld [vmem:[%s5 + $0x98] sm:$0xff]
  %v419 = vld [vmem:[%s5 + $0xa0] sm:$0xff]
  %v420 = vld [vmem:[%s5 + $0xa8] sm:$0xff]
  %v421 = vld [vmem:[%s5 + $0xb0] sm:$0xff]
  %v422 = vld [vmem:[%s5 + $0xb8] sm:$0xff]
  %v423 = vld [vmem:[%s5 + $0xc0] sm:$0xff]
  %v424 = vld [vmem:[%s5 + $0xc8] sm:$0xff]
  %v425 = vld [vmem:[%s5 + $0xd0] sm:$0xff]
  %v426 = vld [vmem:[%s5 + $0xd8] sm:$0xff]
  %v427 = vld [vmem:[%s5 + $0xe0] sm:$0xff]
  %v428 = vld [vmem:[%s5 + $0xe8] sm:$0xff]
  %v429 = vld [vmem:[%s5 + $0xf0] sm:$0xff]
  %v430 = vld [vmem:[%s5 + $0xf8] sm:$0xff]
  %431 = vxpose.xlu0.c.b16.start [1/8] %v391, 128
  %432 = vxpose.xlu0.c.b16.cont [2/8] %v392, 128
  %433 = vxpose.xlu0.c.b16.cont [3/8] %v393, 128
  %434 = vxpose.xlu0.c.b16.cont [4/8] %v394, 128
  %435 = vxpose.xlu0.c.b16.cont [5/8] 0, 128
  %436 = vxpose.xlu0.c.b16.cont [6/8] 0, 128
  %437 = vxpose.xlu0.c.b16.cont [7/8] 0, 128
  %438 = vxpose.xlu0.c.b16.end [8/8] 0, 128
  %v439 = vpop.trf.xlu0
  %v440 = vpop.trf.xlu0
  %v441 = vpop.trf.xlu0
  %v442 = vpop.trf.xlu0
  %v443 = vpop.trf.xlu0
  %v444 = vpop.trf.xlu0
  %v445 = vpop.trf.xlu0
  %v446 = vpop.trf.xlu0
  %v479 = vunpack.c.l.b16 %v399
  %v480 = vunpack.c.h.b16 %v399
  %v481 = vunpack.c.l.b16 %v400
  %v482 = vunpack.c.h.b16 %v400
  %v483 = vunpack.c.l.b16 %v401
  %v484 = vunpack.c.h.b16 %v401
  %v485 = vunpack.c.l.b16 %v402
  %v486 = vunpack.c.h.b16 %v402
  %v487 = vunpack.c.l.b16 %v403
  %v488 = vunpack.c.h.b16 %v403
  %v489 = vunpack.c.l.b16 %v404
  %v490 = vunpack.c.h.b16 %v404
  %v491 = vunpack.c.l.b16 %v405
  %v492 = vunpack.c.h.b16 %v405
  %v493 = vunpack.c.l.b16 %v406
  %v494 = vunpack.c.h.b16 %v406
  %v495 = vunpack.c.l.b16 %v407
  %v496 = vunpack.c.h.b16 %v407
  %v497 = vunpack.c.l.b16 %v408
  %v498 = vunpack.c.h.b16 %v408
  %v499 = vunpack.c.l.b16 %v409
  %v500 = vunpack.c.h.b16 %v409
  %v501 = vunpack.c.l.b16 %v410
  %v502 = vunpack.c.h.b16 %v410
  %v503 = vunpack.c.l.b16 %v411
  %v504 = vunpack.c.h.b16 %v411
  %v505 = vunpack.c.l.b16 %v412
  %v506 = vunpack.c.h.b16 %v412
  %v507 = vunpack.c.l.b16 %v413
  %v508 = vunpack.c.h.b16 %v413
  %v509 = vunpack.c.l.b16 %v414
  %v510 = vunpack.c.h.b16 %v414
  %v511 = vunpack.c.l.b16 %v415
  %v512 = vunpack.c.h.b16 %v415
  %v513 = vunpack.c.l.b16 %v416
  %v514 = vunpack.c.h.b16 %v416
  %v515 = vunpack.c.l.b16 %v417
  %v516 = vunpack.c.h.b16 %v417
  %v517 = vunpack.c.l.b16 %v418
  %v518 = vunpack.c.h.b16 %v418
  %v519 = vunpack.c.l.b16 %v419
  %v520 = vunpack.c.h.b16 %v419
  %v521 = vunpack.c.l.b16 %v420
  %v522 = vunpack.c.h.b16 %v420
  %v523 = vunpack.c.l.b16 %v421
  %v524 = vunpack.c.h.b16 %v421
  %v525 = vunpack.c.l.b16 %v422
  %v526 = vunpack.c.h.b16 %v422
  %v527 = vunpack.c.l.b16 %v423
  %v528 = vunpack.c.h.b16 %v423
  %v529 = vunpack.c.l.b16 %v424
  %v530 = vunpack.c.h.b16 %v424
  %v531 = vunpack.c.l.b16 %v425
  %v532 = vunpack.c.h.b16 %v425
  %v533 = vunpack.c.l.b16 %v426
  %v534 = vunpack.c.h.b16 %v426
  %v535 = vunpack.c.l.b16 %v427
  %v536 = vunpack.c.h.b16 %v427
  %v537 = vunpack.c.l.b16 %v428
  %v538 = vunpack.c.h.b16 %v428
  %v539 = vunpack.c.l.b16 %v429
  %v540 = vunpack.c.h.b16 %v429
  %v541 = vunpack.c.l.b16 %v430
  %v542 = vunpack.c.h.b16 %v430
  %v543 = vpack.c.b16 %v487, %v479
  %v544 = vpack.c.b16 %v488, %v480
  %v545 = vpack.c.b16 %v489, %v481
  %v546 = vpack.c.b16 %v490, %v482
  %v547 = vpack.c.b16 %v491, %v483
  %v548 = vpack.c.b16 %v492, %v484
  %v549 = vpack.c.b16 %v493, %v485
  %v550 = vpack.c.b16 %v494, %v486
  %v551 = vpack.c.b16 %v503, %v495
  %v552 = vpack.c.b16 %v504, %v496
  %v553 = vpack.c.b16 %v505, %v497
  %v554 = vpack.c.b16 %v506, %v498
  %v555 = vpack.c.b16 %v507, %v499
  %v556 = vpack.c.b16 %v508, %v500
  %v557 = vpack.c.b16 %v509, %v501
  %v558 = vpack.c.b16 %v510, %v502
  %v559 = vpack.c.b16 %v519, %v511
  %v560 = vpack.c.b16 %v520, %v512
  %v561 = vpack.c.b16 %v521, %v513
  %v562 = vpack.c.b16 %v522, %v514
  %v563 = vpack.c.b16 %v523, %v515
  %v564 = vpack.c.b16 %v524, %v516
  %v565 = vpack.c.b16 %v525, %v517
  %v566 = vpack.c.b16 %v526, %v518
  %v567 = vpack.c.b16 %v535, %v527
  %v568 = vpack.c.b16 %v536, %v528
  %v569 = vpack.c.b16 %v537, %v529
  %v570 = vpack.c.b16 %v538, %v530
  %v571 = vpack.c.b16 %v539, %v531
  %v572 = vpack.c.b16 %v540, %v532
  %v573 = vpack.c.b16 %v541, %v533
  %v574 = vpack.c.b16 %v542, %v534
  %vm607 = vcmask 523264
  %v609 = vsel %vm607, %v439, 0
  %611 = vmatprep.subr.bf16.mxu0 0
  %612 = vmatpush1.bf16.msra.mxu0 0
  %613 = vmatprep.subr.bf16.mxu0 0
  %614 = vmatpush1.bf16.msra.mxu0 0
  %615 = vmatprep.subr.bf16.mxu0 0
  %616 = vmatpush1.bf16.msra.mxu0 0
  %617 = vmatprep.subr.bf16.mxu0 0
  %618 = vmatpush1.bf16.msra.mxu0 0
  %619 = vmatprep.subr.bf16.mxu0 %v568
  %620 = vmatpush1.bf16.msra.mxu0 %v567
  %621 = vmatprep.subr.bf16.mxu0 %v560
  %622 = vmatpush1.bf16.msra.mxu0 %v559
  %623 = vmatprep.subr.bf16.mxu0 %v552
  %624 = vmatpush1.bf16.msra.mxu0 %v551
  %625 = vmatprep.subr.bf16.mxu0 %v544
  %626 = vmatpush1.bf16.msra.mxu0 %v543
  %627 = vmatprep.subr.bf16.mxu0 0
  %628 = vmatpush2.bf16.msra.mxu0 0
  %629 = vmatprep.subr.bf16.mxu0 0
  %630 = vmatpush2.bf16.msra.mxu0 0
  %631 = vmatprep.subr.bf16.mxu0 0
  %632 = vmatpush2.bf16.msra.mxu0 0
  %633 = vmatprep.subr.bf16.mxu0 0
  %634 = vmatpush2.bf16.msra.mxu0 0
  %635 = vmatprep.subr.bf16.mxu0 0
  %636 = vmatpush2.bf16.msra.mxu0 0
  %637 = vmatprep.subr.bf16.mxu0 0
  %638 = vmatpush2.bf16.msra.mxu0 0
  %639 = vmatprep.subr.bf16.mxu0 0
  %640 = vmatpush2.bf16.msra.mxu0 0
  %641 = vmatprep.subr.bf16.mxu0 0
  %642 = vmatpush2.bf16.msra.mxu0 0
  %643 = vmatprep.mubr.bf16.mxu0 0
  %644 = vmatmul.mubr.bf16.gmra.mxu0 %v609
  %v645 = vpop.f32.mrf.mxu0
  %v646 = vadd.f32 0.0, %v645
  %v647 = vpop.f32.mrf.mxu0
  %v648 = vadd.f32 0.0, %v647
  %v649 = vpop.f32.mrf.mxu0
  %v650 = vpop.f32.mrf.mxu0
  %651 = vdwg.mxu0
  %652 = vmatprep.subr.bf16.mxu0 0
  %653 = vmatpush1.bf16.msra.mxu0 0
  %654 = vmatprep.subr.bf16.mxu0 0
  %655 = vmatpush1.bf16.msra.mxu0 0
  %656 = vmatprep.subr.bf16.mxu0 0
  %657 = vmatpush1.bf16.msra.mxu0 0
  %658 = vmatprep.subr.bf16.mxu0 0
  %659 = vmatpush1.bf16.msra.mxu0 0
  %660 = vmatprep.subr.bf16.mxu0 %v570
  %661 = vmatpush1.bf16.msra.mxu0 %v569
  %662 = vmatprep.subr.bf16.mxu0 %v562
  %663 = vmatpush1.bf16.msra.mxu0 %v561
  %664 = vmatprep.subr.bf16.mxu0 %v554
  %665 = vmatpush1.bf16.msra.mxu0 %v553
  %666 = vmatprep.subr.bf16.mxu0 %v546
  %667 = vmatpush1.bf16.msra.mxu0 %v545
  %668 = vmatprep.subr.bf16.mxu0 0
  %669 = vmatpush2.bf16.msra.mxu0 0
  %670 = vmatprep.subr.bf16.mxu0 0
  %671 = vmatpush2.bf16.msra.mxu0 0
  %672 = vmatprep.subr.bf16.mxu0 0
  %673 = vmatpush2.bf16.msra.mxu0 0
  %674 = vmatprep.subr.bf16.mxu0 0
  %675 = vmatpush2.bf16.msra.mxu0 0
  %676 = vmatprep.subr.bf16.mxu0 0
  %677 = vmatpush2.bf16.msra.mxu0 0
  %678 = vmatprep.subr.bf16.mxu0 0
  %679 = vmatpush2.bf16.msra.mxu0 0
  %680 = vmatprep.subr.bf16.mxu0 0
  %681 = vmatpush2.bf16.msra.mxu0 0
  %682 = vmatprep.subr.bf16.mxu0 0
  %683 = vmatpush2.bf16.msra.mxu0 0
  %684 = vmatprep.mubr.bf16.mxu0 0
  %685 = vmatmul.mubr.bf16.gmra.mxu0 %v609
  %v686 = vpop.f32.mrf.mxu0
  %v687 = vadd.f32 0.0, %v686
  %v688 = vpop.f32.mrf.mxu0
  %v689 = vadd.f32 0.0, %v688
  %v690 = vpop.f32.mrf.mxu0
  %v691 = vpop.f32.mrf.mxu0
  %692 = vdwg.mxu0
  %693 = vmatprep.subr.bf16.mxu0 0
  %694 = vmatpush1.bf16.msra.mxu0 0
  %695 = vmatprep.subr.bf16.mxu0 0
  %696 = vmatpush1.bf16.msra.mxu0 0
  %697 = vmatprep.subr.bf16.mxu0 0
  %698 = vmatpush1.bf16.msra.mxu0 0
  %699 = vmatprep.subr.bf16.mxu0 0
  %700 = vmatpush1.bf16.msra.mxu0 0
  %701 = vmatprep.subr.bf16.mxu0 %v572
  %702 = vmatpush1.bf16.msra.mxu0 %v571
  %703 = vmatprep.subr.bf16.mxu0 %v564
  %704 = vmatpush1.bf16.msra.mxu0 %v563
  %705 = vmatprep.subr.bf16.mxu0 %v556
  %706 = vmatpush1.bf16.msra.mxu0 %v555
  %707 = vmatprep.subr.bf16.mxu0 %v548
  %708 = vmatpush1.bf16.msra.mxu0 %v547
  %709 = vmatprep.subr.bf16.mxu0 0
  %710 = vmatpush2.bf16.msra.mxu0 0
  %711 = vmatprep.subr.bf16.mxu0 0
  %712 = vmatpush2.bf16.msra.mxu0 0
  %713 = vmatprep.subr.bf16.mxu0 0
  %714 = vmatpush2.bf16.msra.mxu0 0
  %715 = vmatprep.subr.bf16.mxu0 0
  %716 = vmatpush2.bf16.msra.mxu0 0
  %717 = vmatprep.subr.bf16.mxu0 0
  %718 = vmatpush2.bf16.msra.mxu0 0
  %719 = vmatprep.subr.bf16.mxu0 0
  %720 = vmatpush2.bf16.msra.mxu0 0
  %721 = vmatprep.subr.bf16.mxu0 0
  %722 = vmatpush2.bf16.msra.mxu0 0
  %723 = vmatprep.subr.bf16.mxu0 0
  %724 = vmatpush2.bf16.msra.mxu0 0
  %725 = vmatprep.mubr.bf16.mxu0 0
  %726 = vmatmul.mubr.bf16.gmra.mxu0 %v609
  %v727 = vpop.f32.mrf.mxu0
  %v728 = vadd.f32 0.0, %v727
  %v729 = vpop.f32.mrf.mxu0
  %v730 = vadd.f32 0.0, %v729
  %v731 = vpop.f32.mrf.mxu0
  %v732 = vpop.f32.mrf.mxu0
  %733 = vdwg.mxu0
  %734 = vmatprep.subr.bf16.mxu0 0
  %735 = vmatpush1.bf16.msra.mxu0 0
  %736 = vmatprep.subr.bf16.mxu0 0
  %737 = vmatpush1.bf16.msra.mxu0 0
  %738 = vmatprep.subr.bf16.mxu0 0
  %739 = vmatpush1.bf16.msra.mxu0 0
  %740 = vmatprep.subr.bf16.mxu0 0
  %741 = vmatpush1.bf16.msra.mxu0 0
  %742 = vmatprep.subr.bf16.mxu0 %v574
  %743 = vmatpush1.bf16.msra.mxu0 %v573
  %744 = vmatprep.subr.bf16.mxu0 %v566
  %745 = vmatpush1.bf16.msra.mxu0 %v565
  %746 = vmatprep.subr.bf16.mxu0 %v558
  %747 = vmatpush1.bf16.msra.mxu0 %v557
  %748 = vmatprep.subr.bf16.mxu0 %v550
  %749 = vmatpush1.bf16.msra.mxu0 %v549
  %750 = vmatprep.subr.bf16.mxu0 0
  %751 = vmatpush2.bf16.msra.mxu0 0
  %752 = vmatprep.subr.bf16.mxu0 0
  %753 = vmatpush2.bf16.msra.mxu0 0
  %754 = vmatprep.subr.bf16.mxu0 0
  %755 = vmatpush2.bf16.msra.mxu0 0
  %756 = vmatprep.subr.bf16.mxu0 0
  %757 = vmatpush2.bf16.msra.mxu0 0
  %758 = vmatprep.subr.bf16.mxu0 0
  %759 = vmatpush2.bf16.msra.mxu0 0
  %760 = vmatprep.subr.bf16.mxu0 0
  %761 = vmatpush2.bf16.msra.mxu0 0
  %762 = vmatprep.subr.bf16.mxu0 0
  %763 = vmatpush2.bf16.msra.mxu0 0
  %764 = vmatprep.subr.bf16.mxu0 0
  %765 = vmatpush2.bf16.msra.mxu0 0
  %766 = vmatprep.mubr.bf16.mxu0 0
  %767 = vmatmul.mubr.bf16.gmra.mxu0 %v609
  %v768 = vpop.f32.mrf.mxu0
  %v769 = vadd.f32 0.0, %v768
  %v770 = vpop.f32.mrf.mxu0
  %v771 = vadd.f32 0.0, %v770
  %v772 = vpop.f32.mrf.mxu0
  %v773 = vpop.f32.mrf.mxu0
  %774 = vdwg.mxu0
  %v783 = vcombine.low %v646, %v648
  %v784 = vcombine.low %v687, %v689
  %v785 = vcombine.low %v728, %v730
  %v786 = vcombine.low %v769, %v771
  %791 = vst [vmem:[%s6] sm:$0x77] %v783
  %792 = vst [vmem:[%s6 + $0x8] sm:$0x77] %v784
  %793 = vst [vmem:[%s6 + $0x10] sm:$0x77] %v785
  %794 = vst [vmem:[%s6 + $0x18] sm:$0x77] %v786
  %795 = vxpose.xlu0.c.b16.start [1/8] %v395, 128
  %796 = vxpose.xlu0.c.b16.cont [2/8] %v396, 128
  %797 = vxpose.xlu0.c.b16.cont [3/8] %v397, 128
  %798 = vxpose.xlu0.c.b16.cont [4/8] %v398, 128
  %799 = vxpose.xlu0.c.b16.cont [5/8] 0, 128
  %800 = vxpose.xlu0.c.b16.cont [6/8] 0, 128
  %801 = vxpose.xlu0.c.b16.cont [7/8] 0, 128
  %802 = vxpose.xlu0.c.b16.end [8/8] 0, 128
  %v803 = vpop.trf.xlu0
  %v804 = vpop.trf.xlu0
  %v805 = vpop.trf.xlu0
  %v806 = vpop.trf.xlu0
  %v807 = vpop.trf.xlu0
  %v808 = vpop.trf.xlu0
  %v809 = vpop.trf.xlu0
  %v810 = vpop.trf.xlu0
  %v812 = vsel %vm607, %v803, 0
  %814 = vmatprep.subr.bf16.mxu0 0
  %815 = vmatpush1.bf16.msra.mxu0 0
  %816 = vmatprep.subr.bf16.mxu0 0
  %817 = vmatpush1.bf16.msra.mxu0 0
  %818 = vmatprep.subr.bf16.mxu0 0
  %819 = vmatpush1.bf16.msra.mxu0 0
  %820 = vmatprep.subr.bf16.mxu0 0
  %821 = vmatpush1.bf16.msra.mxu0 0
  %822 = vmatprep.subr.bf16.mxu0 %v568
  %823 = vmatpush1.bf16.msra.mxu0 %v567
  %824 = vmatprep.subr.bf16.mxu0 %v560
  %825 = vmatpush1.bf16.msra.mxu0 %v559
  %826 = vmatprep.subr.bf16.mxu0 %v552
  %827 = vmatpush1.bf16.msra.mxu0 %v551
  %828 = vmatprep.subr.bf16.mxu0 %v544
  %829 = vmatpush1.bf16.msra.mxu0 %v543
  %830 = vmatprep.subr.bf16.mxu0 0
  %831 = vmatpush2.bf16.msra.mxu0 0
  %832 = vmatprep.subr.bf16.mxu0 0
  %833 = vmatpush2.bf16.msra.mxu0 0
  %834 = vmatprep.subr.bf16.mxu0 0
  %835 = vmatpush2.bf16.msra.mxu0 0
  %836 = vmatprep.subr.bf16.mxu0 0
  %837 = vmatpush2.bf16.msra.mxu0 0
  %838 = vmatprep.subr.bf16.mxu0 0
  %839 = vmatpush2.bf16.msra.mxu0 0
  %840 = vmatprep.subr.bf16.mxu0 0
  %841 = vmatpush2.bf16.msra.mxu0 0
  %842 = vmatprep.subr.bf16.mxu0 0
  %843 = vmatpush2.bf16.msra.mxu0 0
  %844 = vmatprep.subr.bf16.mxu0 0
  %845 = vmatpush2.bf16.msra.mxu0 0
  %846 = vmatprep.mubr.bf16.mxu0 0
  %847 = vmatmul.mubr.bf16.gmra.mxu0 %v812
  %v848 = vpop.f32.mrf.mxu0
  %v849 = vadd.f32 0.0, %v848
  %v850 = vpop.f32.mrf.mxu0
  %v851 = vadd.f32 0.0, %v850
  %v852 = vpop.f32.mrf.mxu0
  %v853 = vpop.f32.mrf.mxu0
  %854 = vdwg.mxu0
  %855 = vmatprep.subr.bf16.mxu0 0
  %856 = vmatpush1.bf16.msra.mxu0 0
  %857 = vmatprep.subr.bf16.mxu0 0
  %858 = vmatpush1.bf16.msra.mxu0 0
  %859 = vmatprep.subr.bf16.mxu0 0
  %860 = vmatpush1.bf16.msra.mxu0 0
  %861 = vmatprep.subr.bf16.mxu0 0
  %862 = vmatpush1.bf16.msra.mxu0 0
  %863 = vmatprep.subr.bf16.mxu0 %v570
  %864 = vmatpush1.bf16.msra.mxu0 %v569
  %865 = vmatprep.subr.bf16.mxu0 %v562
  %866 = vmatpush1.bf16.msra.mxu0 %v561
  %867 = vmatprep.subr.bf16.mxu0 %v554
  %868 = vmatpush1.bf16.msra.mxu0 %v553
  %869 = vmatprep.subr.bf16.mxu0 %v546
  %870 = vmatpush1.bf16.msra.mxu0 %v545
  %871 = vmatprep.subr.bf16.mxu0 0
  %872 = vmatpush2.bf16.msra.mxu0 0
  %873 = vmatprep.subr.bf16.mxu0 0
  %874 = vmatpush2.bf16.msra.mxu0 0
  %875 = vmatprep.subr.bf16.mxu0 0
  %876 = vmatpush2.bf16.msra.mxu0 0
  %877 = vmatprep.subr.bf16.mxu0 0
  %878 = vmatpush2.bf16.msra.mxu0 0
  %879 = vmatprep.subr.bf16.mxu0 0
  %880 = vmatpush2.bf16.msra.mxu0 0
  %881 = vmatprep.subr.bf16.mxu0 0
  %882 = vmatpush2.bf16.msra.mxu0 0
  %883 = vmatprep.subr.bf16.mxu0 0
  %884 = vmatpush2.bf16.msra.mxu0 0
  %885 = vmatprep.subr.bf16.mxu0 0
  %886 = vmatpush2.bf16.msra.mxu0 0
  %887 = vmatprep.mubr.bf16.mxu0 0
  %888 = vmatmul.mubr.bf16.gmra.mxu0 %v812
  %v889 = vpop.f32.mrf.mxu0
  %v890 = vadd.f32 0.0, %v889
  %v891 = vpop.f32.mrf.mxu0
  %v892 = vadd.f32 0.0, %v891
  %v893 = vpop.f32.mrf.mxu0
  %v894 = vpop.f32.mrf.mxu0
  %895 = vdwg.mxu0
  %896 = vmatprep.subr.bf16.mxu0 0
  %897 = vmatpush1.bf16.msra.mxu0 0
  %898 = vmatprep.subr.bf16.mxu0 0
  %899 = vmatpush1.bf16.msra.mxu0 0
  %900 = vmatprep.subr.bf16.mxu0 0
  %901 = vmatpush1.bf16.msra.mxu0 0
  %902 = vmatprep.subr.bf16.mxu0 0
  %903 = vmatpush1.bf16.msra.mxu0 0
  %904 = vmatprep.subr.bf16.mxu0 %v572
  %905 = vmatpush1.bf16.msra.mxu0 %v571
  %906 = vmatprep.subr.bf16.mxu0 %v564
  %907 = vmatpush1.bf16.msra.mxu0 %v563
  %908 = vmatprep.subr.bf16.mxu0 %v556
  %909 = vmatpush1.bf16.msra.mxu0 %v555
  %910 = vmatprep.subr.bf16.mxu0 %v548
  %911 = vmatpush1.bf16.msra.mxu0 %v547
  %912 = vmatprep.subr.bf16.mxu0 0
  %913 = vmatpush2.bf16.msra.mxu0 0
  %914 = vmatprep.subr.bf16.mxu0 0
  %915 = vmatpush2.bf16.msra.mxu0 0
  %916 = vmatprep.subr.bf16.mxu0 0
  %917 = vmatpush2.bf16.msra.mxu0 0
  %918 = vmatprep.subr.bf16.mxu0 0
  %919 = vmatpush2.bf16.msra.mxu0 0
  %920 = vmatprep.subr.bf16.mxu0 0
  %921 = vmatpush2.bf16.msra.mxu0 0
  %922 = vmatprep.subr.bf16.mxu0 0
  %923 = vmatpush2.bf16.msra.mxu0 0
  %924 = vmatprep.subr.bf16.mxu0 0
  %925 = vmatpush2.bf16.msra.mxu0 0
  %926 = vmatprep.subr.bf16.mxu0 0
  %927 = vmatpush2.bf16.msra.mxu0 0
  %928 = vmatprep.mubr.bf16.mxu0 0
  %929 = vmatmul.mubr.bf16.gmra.mxu0 %v812
  %v930 = vpop.f32.mrf.mxu0
  %v931 = vadd.f32 0.0, %v930
  %v932 = vpop.f32.mrf.mxu0
  %v933 = vadd.f32 0.0, %v932
  %v934 = vpop.f32.mrf.mxu0
  %v935 = vpop.f32.mrf.mxu0
  %936 = vdwg.mxu0
  %937 = vmatprep.subr.bf16.mxu0 0
  %938 = vmatpush1.bf16.msra.mxu0 0
  %939 = vmatprep.subr.bf16.mxu0 0
  %940 = vmatpush1.bf16.msra.mxu0 0
  %941 = vmatprep.subr.bf16.mxu0 0
  %942 = vmatpush1.bf16.msra.mxu0 0
  %943 = vmatprep.subr.bf16.mxu0 0
  %944 = vmatpush1.bf16.msra.mxu0 0
  %945 = vmatprep.subr.bf16.mxu0 %v574
  %946 = vmatpush1.bf16.msra.mxu0 %v573
  %947 = vmatprep.subr.bf16.mxu0 %v566
  %948 = vmatpush1.bf16.msra.mxu0 %v565
  %949 = vmatprep.subr.bf16.mxu0 %v558
  %950 = vmatpush1.bf16.msra.mxu0 %v557
  %951 = vmatprep.subr.bf16.mxu0 %v550
  %952 = vmatpush1.bf16.msra.mxu0 %v549
  %953 = vmatprep.subr.bf16.mxu0 0
  %954 = vmatpush2.bf16.msra.mxu0 0
  %955 = vmatprep.subr.bf16.mxu0 0
  %956 = vmatpush2.bf16.msra.mxu0 0
  %957 = vmatprep.subr.bf16.mxu0 0
  %958 = vmatpush2.bf16.msra.mxu0 0
  %959 = vmatprep.subr.bf16.mxu0 0
  %960 = vmatpush2.bf16.msra.mxu0 0
  %961 = vmatprep.subr.bf16.mxu0 0
  %962 = vmatpush2.bf16.msra.mxu0 0
  %963 = vmatprep.subr.bf16.mxu0 0
  %964 = vmatpush2.bf16.msra.mxu0 0
  %965 = vmatprep.subr.bf16.mxu0 0
  %966 = vmatpush2.bf16.msra.mxu0 0
  %967 = vmatprep.subr.bf16.mxu0 0
  %968 = vmatpush2.bf16.msra.mxu0 0
  %969 = vmatprep.mubr.bf16.mxu0 0
  %970 = vmatmul.mubr.bf16.gmra.mxu0 %v812
  %v971 = vpop.f32.mrf.mxu0
  %v972 = vadd.f32 0.0, %v971
  %v973 = vpop.f32.mrf.mxu0
  %v974 = vadd.f32 0.0, %v973
  %v975 = vpop.f32.mrf.mxu0
  %v976 = vpop.f32.mrf.mxu0
  %977 = vdwg.mxu0
  %v986 = vcombine.low %v849, %v851
  %v987 = vcombine.low %v890, %v892
  %v988 = vcombine.low %v931, %v933
  %v989 = vcombine.low %v972, %v974
  %s994 = scalar_lea.vmem %s6, 32
  %995 = vst [vmem:[%s994] sm:$0x77] %v986
  %996 = vst [vmem:[%s994 + $0x8] sm:$0x77] %v987
  %997 = vst [vmem:[%s994 + $0x10] sm:$0x77] %v988
  %998 = vst [vmem:[%s994 + $0x18] sm:$0x77] %v989
  // Predicated region
  $region26: #{seg_model_forward.1} parent=0 // pred_check
    _
  $region27: #{seg_model_forward.1} parent=0 // pred_check_branch
    %1000 = sbr.rel (0) target = $region29
  $region28: #{seg_model_forward.1} parent=0 // pred_region
    _
  $region29: #{seg_model_forward.1} parent=0 // pred_fallthru
    _
  // Predicated region
  $region30: #{seg_model_forward.1} parent=0 // pred_check
    _
  $region31: #{seg_model_forward.1} parent=0 // pred_check_branch
    %1002 = sbr.rel (0) target = $region33
  $region32: #{seg_model_forward.1} parent=0 // pred_region
    _
  $region33: #{seg_model_forward.1} parent=0 // pred_fallthru
    _

</llo_original>
